<compile_context>
chip_gen: v7x
topology: tpu7x:2x2x1
jax: 0.10.0
libtpu: 0.0.40
codegen_flags: <defaults>
</compile_context>

<pallas_src>
import functools
import math

import jax
import jax.numpy as jnp
from jax.experimental import pallas as pl
from jax.experimental.pallas import tpu as pltpu

EPS = 1e-5


def _round_up(n, m):
    return ((n + m - 1) // m) * m


def _pad_to(a, shape):
    pads = [(0, t - s) for s, t in zip(a.shape, shape)]
    return jnp.pad(a, pads)


def _encoder_layer_kernel(
    x_ref,                 # (SB, Dp)  zero-padded tokens, row = s*B + b
    mask_ref,              # (SB, SB)  additive attention mask (0 / -1e30)
    wqkv_ref, bqkv_ref,    # (Dp, 3*Dp), (1, 3*Dp)  (1/sqrt(d) folded into Q part)
    wo_ref, bo_ref,        # (Dp, Dp), (1, Dp)
    g1_ref, be1_ref,       # (1, Dp) layernorm1 gamma/beta (zero in padded lanes)
    w1_ref, b1_ref,        # (Dp, Fp), (1, Fp)
    w2_ref, b2_ref,        # (Fp, Dp), (1, Dp)
    g2_ref, be2_ref,       # (1, Dp)
    o_ref,                 # (SB, Dp)
    *, d_real,
):
    x = x_ref[...]                                   # (SB, Dp) f32
    dp = x.shape[-1]

    # lane mask over the real (unpadded) feature positions, for LayerNorm stats
    lane = jax.lax.broadcasted_iota(jnp.int32, (1, dp), 1)
    dmask = (lane < d_real).astype(jnp.float32)
    inv_d = 1.0 / float(d_real)

    # ---- fused QKV projection over all B*S tokens ----
    qkv = jnp.dot(x, wqkv_ref[...], preferred_element_type=jnp.float32) + bqkv_ref[...]
    q = qkv[:, 0:dp]
    k = qkv[:, dp:2 * dp]
    v = qkv[:, 2 * dp:3 * dp]

    # ---- attention: joint (SB, SB) scores, block-diagonal mask per batch ----
    scores = jax.lax.dot_general(
        q, k, (((1,), (1,)), ((), ())), preferred_element_type=jnp.float32)
    scores = scores + mask_ref[...]
    scores = scores - jnp.max(scores, axis=-1, keepdims=True)
    p = jnp.exp(scores)
    p = p * pl.reciprocal(jnp.sum(p, axis=-1, keepdims=True), approx=True)
    attn = jnp.dot(p, v, preferred_element_type=jnp.float32)
    attn = jnp.dot(attn, wo_ref[...], preferred_element_type=jnp.float32) + bo_ref[...]

    # ---- masked LayerNorm (stats over the d_real real lanes only) ----
    def layer_norm(z, g, b):
        mu = jnp.sum(z, axis=-1, keepdims=True) * inv_d
        c = (z - mu) * dmask
        var = jnp.sum(c * c, axis=-1, keepdims=True) * inv_d
        return c * jax.lax.rsqrt(var + EPS) * g + b

    # ---- residual + norm1 ----
    x1 = layer_norm(x + attn, g1_ref[...], be1_ref[...])

    # ---- feed forward (relu) ----
    h = jnp.dot(x1, w1_ref[...], preferred_element_type=jnp.float32) + b1_ref[...]
    h = jnp.maximum(h, 0.0)
    y = jnp.dot(h, w2_ref[...], preferred_element_type=jnp.float32) + b2_ref[...]

    # ---- residual + norm2 ----
    o_ref[...] = layer_norm(x1 + y, g2_ref[...], be2_ref[...]).astype(o_ref.dtype)


def transformer_block_forward(x_nchw, params):
    """x_nchw: (N, C, H, W) float32.  Returns (N, C, H*W) float32."""
    N, C, H, W = x_nchw.shape
    D = H * W
    Dff = params["w1"].shape[1]
    S, B = N, C                       # seq = N, attention batch = C
    SB = S * B
    Dp = _round_up(D, 128)            # lane-dense model dim
    Fp = _round_up(Dff, 128)          # lane-dense FFN dim

    scale = 1.0 / math.sqrt(D)

    # tokens: natural flatten order (row = s*B + b), zero-pad features to Dp
    xf = _pad_to(x_nchw.reshape(SB, D), (SB, Dp)).astype(jnp.float32)

    # fused + pre-scaled + zero-padded QKV weights/biases
    wq = _pad_to(params["wq"] * scale, (Dp, Dp))
    wk = _pad_to(params["wk"], (Dp, Dp))
    wv = _pad_to(params["wv"], (Dp, Dp))
    wqkv = jnp.concatenate([wq, wk, wv], axis=1)            # (Dp, 3*Dp)
    bq = _pad_to(params["bq"] * scale, (1, Dp))
    bk = _pad_to(params["bk"], (1, Dp))
    bv = _pad_to(params["bv"], (1, Dp))
    bqkv = jnp.concatenate([bq, bk, bv], axis=1)             # (1, 3*Dp)

    wo = _pad_to(params["wo"], (Dp, Dp))
    bo = _pad_to(params["bo"], (1, Dp))
    g1 = _pad_to(params["g1"], (1, Dp))
    be1 = _pad_to(params["be1"], (1, Dp))
    w1 = _pad_to(params["w1"], (Dp, Fp))
    b1 = _pad_to(params["bb1"], (1, Fp))
    w2 = _pad_to(params["w2"], (Fp, Dp))
    b2 = _pad_to(params["bb2"], (1, Dp))
    g2 = _pad_to(params["g2"], (1, Dp))
    be2 = _pad_to(params["be2"], (1, Dp))

    # block-diagonal additive attention mask: rows i, j interact iff same batch
    row_b = jnp.arange(SB, dtype=jnp.int32) % B
    attn_bias = jnp.where(row_b[:, None] == row_b[None, :], 0.0, -1e30)
    attn_bias = attn_bias.astype(jnp.float32)

    args = (xf, attn_bias, wqkv, bqkv, wo, bo, g1, be1,
            w1, b1, w2, b2, g2, be2)

    flops = (2 * SB * Dp * 3 * Dp        # fused QKV
             + 2 * SB * SB * Dp          # scores
             + 2 * SB * SB * Dp          # P @ V
             + 2 * SB * Dp * Dp          # out proj
             + 2 * SB * Dp * Fp          # ffn1
             + 2 * SB * Fp * Dp)         # ffn2
    bytes_accessed = 4 * (sum(int(a.size) for a in args) + SB * Dp)

    vmem_spec = lambda: pl.BlockSpec(memory_space=pltpu.MemorySpace.VMEM)

    out = pl.pallas_call(
        functools.partial(_encoder_layer_kernel, d_real=D),
        out_shape=jax.ShapeDtypeStruct((SB, Dp), jnp.float32),
        in_specs=[vmem_spec() for _ in args],
        out_specs=vmem_spec(),
        cost_estimate=pl.CostEstimate(
            flops=flops, transcendentals=SB * SB, bytes_accessed=bytes_accessed),
    )(*args)

    # strip the lane padding, restore (N, C, D)
    return out[:, :D].reshape(N, C, D)


def init_params(key, d_model, d_ff):
    ks = jax.random.split(key, 8)
    s = 0.02
    return {
        "wq": jax.random.normal(ks[0], (d_model, d_model), jnp.float32) * s,
        "wk": jax.random.normal(ks[1], (d_model, d_model), jnp.float32) * s,
        "wv": jax.random.normal(ks[2], (d_model, d_model), jnp.float32) * s,
        "bq": jnp.zeros((1, d_model), jnp.float32),
        "bk": jnp.zeros((1, d_model), jnp.float32),
        "bv": jnp.zeros((1, d_model), jnp.float32),
        "wo": jax.random.normal(ks[3], (d_model, d_model), jnp.float32) * s,
        "bo": jax.random.normal(ks[4], (1, d_model), jnp.float32) * s,
        "g1": jnp.ones((1, d_model), jnp.float32),
        "be1": jnp.zeros((1, d_model), jnp.float32),
        "w1": jax.random.normal(ks[5], (d_model, d_ff), jnp.float32) * s,
        "bb1": jax.random.normal(ks[6], (1, d_ff), jnp.float32) * s,
        "w2": jax.random.normal(ks[7], (d_ff, d_model), jnp.float32) * s,
        "bb2": jnp.zeros((1, d_model), jnp.float32),
        "g2": jnp.ones((1, d_model), jnp.float32),
        "be2": jnp.zeros((1, d_model), jnp.float32),
    }


def reference_forward(x_nchw, p):
    """Pure-JAX reference of the same math (eval-mode encoder layer)."""
    N, C, H, W = x_nchw.shape
    D = H * W
    x = x_nchw.reshape(N, C, D)                  # (S, B, D)
    q = x @ p["wq"] + p["bq"]
    k = x @ p["wk"] + p["bk"]
    v = x @ p["wv"] + p["bv"]
    scores = jnp.einsum("sbd,tbd->bst", q, k) / math.sqrt(D)
    w = jax.nn.softmax(scores, axis=-1)
    attn = jnp.einsum("bst,tbd->sbd", w, v)
    attn = attn @ p["wo"] + p["bo"]

    def ln(z, g, b):
        mu = jnp.mean(z, axis=-1, keepdims=True)
        var = jnp.mean((z - mu) ** 2, axis=-1, keepdims=True)
        return (z - mu) / jnp.sqrt(var + EPS) * g + b

    x1 = ln(x + attn, p["g1"], p["be1"])
    y = jnp.maximum(x1 @ p["w1"] + p["bb1"], 0.0) @ p["w2"] + p["bb2"]
    return ln(x1 + y, p["g2"], p["be2"])


if __name__ == "__main__":
    # input_size=(·, ·, 9, 9) -> embed_dim = 81, dim_feedforward = 162
    H = W = 9
    D = H * W
    Dff = 2 * D
    N, C = 2, 4                                   # seq=2, attention batch=4

    key = jax.random.PRNGKey(0)
    kx, kp = jax.random.split(key)
    x = jax.random.normal(kx, (N, C, H, W), jnp.float32)
    params = init_params(kp, D, Dff)

    fwd = jax.jit(transformer_block_forward)
    out = jax.block_until_ready(fwd(x, params))

    ref = reference_forward(x, params)
    assert out.shape == (N, C, D)
    assert jnp.allclose(out, ref, atol=1e-3, rtol=1e-3), "mismatch vs reference"

    print("KERNEL_OK")
</pallas_src>

<mosaic_0001>
module attributes {stable_mosaic.version = 11 : i64} {
  func.func @_encoder_layer_kernel(%arg0: memref<8x128xf32, #tpu.memory_space<vmem>>, %arg1: memref<8x8xf32, #tpu.memory_space<vmem>>, %arg2: memref<128x384xf32, #tpu.memory_space<vmem>>, %arg3: memref<1x384xf32, #tpu.memory_space<vmem>>, %arg4: memref<128x128xf32, #tpu.memory_space<vmem>>, %arg5: memref<1x128xf32, #tpu.memory_space<vmem>>, %arg6: memref<1x128xf32, #tpu.memory_space<vmem>>, %arg7: memref<1x128xf32, #tpu.memory_space<vmem>>, %arg8: memref<128x256xf32, #tpu.memory_space<vmem>>, %arg9: memref<1x256xf32, #tpu.memory_space<vmem>>, %arg10: memref<256x128xf32, #tpu.memory_space<vmem>>, %arg11: memref<1x128xf32, #tpu.memory_space<vmem>>, %arg12: memref<1x128xf32, #tpu.memory_space<vmem>>, %arg13: memref<1x128xf32, #tpu.memory_space<vmem>>, %arg14: memref<8x128xf32, #tpu.memory_space<vmem>>) attributes {dimension_semantics = [], scalar_prefetch = 0 : i64, scratch_operands = 0 : i64, tpu.core_type = #tpu.core_type<tc>} {
    %c0 = arith.constant 0 : index
    %c0_0 = arith.constant 0 : index
    %0 = vector.load %arg0[%c0, %c0_0] : memref<8x128xf32, #tpu.memory_space<vmem>>, vector<8x128xf32>
    %1 = tpu.iota {dimensions = array<i32: 1>} : vector<1x128xi32>
    %c81_i32 = arith.constant 81 : i32
    %2 = vector.broadcast %c81_i32 : i32 to vector<1x128xi32>
    %3 = arith.cmpi slt, %1, %2 : vector<1x128xi32>
    %4 = arith.extui %3 : vector<1x128xi1> to vector<1x128xi32>
    %5 = arith.sitofp %4 : vector<1x128xi32> to vector<1x128xf32>
    %c0_1 = arith.constant 0 : index
    %c0_2 = arith.constant 0 : index
    %6 = vector.load %arg2[%c0_1, %c0_2] : memref<128x384xf32, #tpu.memory_space<vmem>>, vector<128x384xf32>
    %cst = arith.constant dense<0.000000e+00> : vector<8x384xf32>
    %7 = tpu.matmul %0, %6, %cst {dimension_numbers = #tpu.dot_dimension_numbers<[1], [0], [0], [1], [0, 0, 1, 1], [], []>} : vector<8x128xf32>, vector<128x384xf32>, vector<8x384xf32> -> vector<8x384xf32>
    %c0_3 = arith.constant 0 : index
    %c0_4 = arith.constant 0 : index
    %8 = vector.load %arg3[%c0_3, %c0_4] : memref<1x384xf32, #tpu.memory_space<vmem>>, vector<1x384xf32>
    %9 = vector.broadcast %8 : vector<1x384xf32> to vector<8x384xf32>
    %10 = arith.addf %7, %9 : vector<8x384xf32>
    %11 = vector.extract_strided_slice %10 {offsets = [0, 0], sizes = [8, 128], strides = [1, 1]} : vector<8x384xf32> to vector<8x128xf32>
    %12 = vector.extract_strided_slice %10 {offsets = [0, 128], sizes = [8, 128], strides = [1, 1]} : vector<8x384xf32> to vector<8x128xf32>
    %13 = vector.extract_strided_slice %10 {offsets = [0, 256], sizes = [8, 128], strides = [1, 1]} : vector<8x384xf32> to vector<8x128xf32>
    %cst_5 = arith.constant dense<0.000000e+00> : vector<8x8xf32>
    %14 = tpu.matmul %11, %12, %cst_5 {dimension_numbers = #tpu.dot_dimension_numbers<[1], [1], [0], [0], [0, 0, 1, 0], [], []>} : vector<8x128xf32>, vector<8x128xf32>, vector<8x8xf32> -> vector<8x8xf32>
    %c0_6 = arith.constant 0 : index
    %c0_7 = arith.constant 0 : index
    %15 = vector.load %arg1[%c0_6, %c0_7] : memref<8x8xf32, #tpu.memory_space<vmem>>, vector<8x8xf32>
    %16 = arith.addf %14, %15 : vector<8x8xf32>
    %cst_8 = arith.constant dense<0xFF800000> : vector<8xf32>
    %17 = vector.multi_reduction <maximumf>, %16, %cst_8 [1] : vector<8x8xf32> to vector<8xf32>
    %18 = vector.shape_cast %17 : vector<8xf32> to vector<8x1xf32>
    %19 = vector.broadcast %18 : vector<8x1xf32> to vector<8x8xf32>
    %20 = arith.subf %16, %19 : vector<8x8xf32>
    %21 = math.exp %20 : vector<8x8xf32>
    %cst_9 = arith.constant dense<0.000000e+00> : vector<8xf32>
    %22 = vector.multi_reduction <add>, %21, %cst_9 [1] : vector<8x8xf32> to vector<8xf32>
    %23 = vector.shape_cast %22 : vector<8xf32> to vector<8x1xf32>
    %24 = tpu.reciprocal %23 {approx = true} : vector<8x1xf32> -> vector<8x1xf32>
    %25 = vector.broadcast %24 : vector<8x1xf32> to vector<8x8xf32>
    %26 = arith.mulf %21, %25 : vector<8x8xf32>
    %cst_10 = arith.constant dense<0.000000e+00> : vector<8x128xf32>
    %27 = tpu.matmul %26, %13, %cst_10 {dimension_numbers = #tpu.dot_dimension_numbers<[1], [0], [0], [1], [0, 0, 1, 1], [], []>} : vector<8x8xf32>, vector<8x128xf32>, vector<8x128xf32> -> vector<8x128xf32>
    %c0_11 = arith.constant 0 : index
    %c0_12 = arith.constant 0 : index
    %28 = vector.load %arg4[%c0_11, %c0_12] : memref<128x128xf32, #tpu.memory_space<vmem>>, vector<128x128xf32>
    %cst_13 = arith.constant dense<0.000000e+00> : vector<8x128xf32>
    %29 = tpu.matmul %27, %28, %cst_13 {dimension_numbers = #tpu.dot_dimension_numbers<[1], [0], [0], [1], [0, 0, 1, 1], [], []>} : vector<8x128xf32>, vector<128x128xf32>, vector<8x128xf32> -> vector<8x128xf32>
    %c0_14 = arith.constant 0 : index
    %c0_15 = arith.constant 0 : index
    %30 = vector.load %arg5[%c0_14, %c0_15] : memref<1x128xf32, #tpu.memory_space<vmem>>, vector<1x128xf32>
    %31 = vector.broadcast %30 : vector<1x128xf32> to vector<8x128xf32>
    %32 = arith.addf %29, %31 : vector<8x128xf32>
    %33 = arith.addf %0, %32 : vector<8x128xf32>
    %c0_16 = arith.constant 0 : index
    %c0_17 = arith.constant 0 : index
    %34 = vector.load %arg6[%c0_16, %c0_17] : memref<1x128xf32, #tpu.memory_space<vmem>>, vector<1x128xf32>
    %c0_18 = arith.constant 0 : index
    %c0_19 = arith.constant 0 : index
    %35 = vector.load %arg7[%c0_18, %c0_19] : memref<1x128xf32, #tpu.memory_space<vmem>>, vector<1x128xf32>
    %cst_20 = arith.constant dense<0.000000e+00> : vector<8xf32>
    %36 = vector.multi_reduction <add>, %33, %cst_20 [1] : vector<8x128xf32> to vector<8xf32>
    %37 = vector.shape_cast %36 : vector<8xf32> to vector<8x1xf32>
    %cst_21 = arith.constant 0.0123456791 : f32
    %38 = vector.broadcast %cst_21 : f32 to vector<8x1xf32>
    %39 = arith.mulf %37, %38 : vector<8x1xf32>
    %40 = vector.broadcast %39 : vector<8x1xf32> to vector<8x128xf32>
    %41 = arith.subf %33, %40 : vector<8x128xf32>
    %42 = vector.broadcast %5 : vector<1x128xf32> to vector<8x128xf32>
    %43 = arith.mulf %41, %42 : vector<8x128xf32>
    %44 = arith.mulf %43, %43 : vector<8x128xf32>
    %cst_22 = arith.constant dense<0.000000e+00> : vector<8xf32>
    %45 = vector.multi_reduction <add>, %44, %cst_22 [1] : vector<8x128xf32> to vector<8xf32>
    %46 = vector.shape_cast %45 : vector<8xf32> to vector<8x1xf32>
    %cst_23 = arith.constant 0.0123456791 : f32
    %47 = vector.broadcast %cst_23 : f32 to vector<8x1xf32>
    %48 = arith.mulf %46, %47 : vector<8x1xf32>
    %cst_24 = arith.constant 9.99999974E-6 : f32
    %49 = vector.broadcast %cst_24 : f32 to vector<8x1xf32>
    %50 = arith.addf %48, %49 : vector<8x1xf32>
    %51 = math.rsqrt %50 : vector<8x1xf32>
    %52 = vector.broadcast %51 : vector<8x1xf32> to vector<8x128xf32>
    %53 = arith.mulf %43, %52 : vector<8x128xf32>
    %54 = vector.broadcast %34 : vector<1x128xf32> to vector<8x128xf32>
    %55 = arith.mulf %53, %54 : vector<8x128xf32>
    %56 = vector.broadcast %35 : vector<1x128xf32> to vector<8x128xf32>
    %57 = arith.addf %55, %56 : vector<8x128xf32>
    %c0_25 = arith.constant 0 : index
    %c0_26 = arith.constant 0 : index
    %58 = vector.load %arg8[%c0_25, %c0_26] : memref<128x256xf32, #tpu.memory_space<vmem>>, vector<128x256xf32>
    %cst_27 = arith.constant dense<0.000000e+00> : vector<8x256xf32>
    %59 = tpu.matmul %57, %58, %cst_27 {dimension_numbers = #tpu.dot_dimension_numbers<[1], [0], [0], [1], [0, 0, 1, 1], [], []>} : vector<8x128xf32>, vector<128x256xf32>, vector<8x256xf32> -> vector<8x256xf32>
    %c0_28 = arith.constant 0 : index
    %c0_29 = arith.constant 0 : index
    %60 = vector.load %arg9[%c0_28, %c0_29] : memref<1x256xf32, #tpu.memory_space<vmem>>, vector<1x256xf32>
    %61 = vector.broadcast %60 : vector<1x256xf32> to vector<8x256xf32>
    %62 = arith.addf %59, %61 : vector<8x256xf32>
    %cst_30 = arith.constant 0.000000e+00 : f32
    %63 = vector.broadcast %cst_30 : f32 to vector<8x256xf32>
    %64 = arith.maximumf %62, %63 : vector<8x256xf32>
    %c0_31 = arith.constant 0 : index
    %c0_32 = arith.constant 0 : index
    %65 = vector.load %arg10[%c0_31, %c0_32] : memref<256x128xf32, #tpu.memory_space<vmem>>, vector<256x128xf32>
    %cst_33 = arith.constant dense<0.000000e+00> : vector<8x128xf32>
    %66 = tpu.matmul %64, %65, %cst_33 {dimension_numbers = #tpu.dot_dimension_numbers<[1], [0], [0], [1], [0, 0, 1, 1], [], []>} : vector<8x256xf32>, vector<256x128xf32>, vector<8x128xf32> -> vector<8x128xf32>
    %c0_34 = arith.constant 0 : index
    %c0_35 = arith.constant 0 : index
    %67 = vector.load %arg11[%c0_34, %c0_35] : memref<1x128xf32, #tpu.memory_space<vmem>>, vector<1x128xf32>
    %68 = vector.broadcast %67 : vector<1x128xf32> to vector<8x128xf32>
    %69 = arith.addf %66, %68 : vector<8x128xf32>
    %70 = arith.addf %57, %69 : vector<8x128xf32>
    %c0_36 = arith.constant 0 : index
    %c0_37 = arith.constant 0 : index
    %71 = vector.load %arg12[%c0_36, %c0_37] : memref<1x128xf32, #tpu.memory_space<vmem>>, vector<1x128xf32>
    %c0_38 = arith.constant 0 : index
    %c0_39 = arith.constant 0 : index
    %72 = vector.load %arg13[%c0_38, %c0_39] : memref<1x128xf32, #tpu.memory_space<vmem>>, vector<1x128xf32>
    %cst_40 = arith.constant dense<0.000000e+00> : vector<8xf32>
    %73 = vector.multi_reduction <add>, %70, %cst_40 [1] : vector<8x128xf32> to vector<8xf32>
    %74 = vector.shape_cast %73 : vector<8xf32> to vector<8x1xf32>
    %cst_41 = arith.constant 0.0123456791 : f32
    %75 = vector.broadcast %cst_41 : f32 to vector<8x1xf32>
    %76 = arith.mulf %74, %75 : vector<8x1xf32>
    %77 = vector.broadcast %76 : vector<8x1xf32> to vector<8x128xf32>
    %78 = arith.subf %70, %77 : vector<8x128xf32>
    %79 = vector.broadcast %5 : vector<1x128xf32> to vector<8x128xf32>
    %80 = arith.mulf %78, %79 : vector<8x128xf32>
    %81 = arith.mulf %80, %80 : vector<8x128xf32>
    %cst_42 = arith.constant dense<0.000000e+00> : vector<8xf32>
    %82 = vector.multi_reduction <add>, %81, %cst_42 [1] : vector<8x128xf32> to vector<8xf32>
    %83 = vector.shape_cast %82 : vector<8xf32> to vector<8x1xf32>
    %cst_43 = arith.constant 0.0123456791 : f32
    %84 = vector.broadcast %cst_43 : f32 to vector<8x1xf32>
    %85 = arith.mulf %83, %84 : vector<8x1xf32>
    %cst_44 = arith.constant 9.99999974E-6 : f32
    %86 = vector.broadcast %cst_44 : f32 to vector<8x1xf32>
    %87 = arith.addf %85, %86 : vector<8x1xf32>
    %88 = math.rsqrt %87 : vector<8x1xf32>
    %89 = vector.broadcast %88 : vector<8x1xf32> to vector<8x128xf32>
    %90 = arith.mulf %80, %89 : vector<8x128xf32>
    %91 = vector.broadcast %71 : vector<1x128xf32> to vector<8x128xf32>
    %92 = arith.mulf %90, %91 : vector<8x128xf32>
    %93 = vector.broadcast %72 : vector<1x128xf32> to vector<8x128xf32>
    %94 = arith.addf %92, %93 : vector<8x128xf32>
    %c0_45 = arith.constant 0 : index
    %c0_46 = arith.constant 0 : index
    %95 = vector.load %arg14[%c0_45, %c0_46] : memref<8x128xf32, #tpu.memory_space<vmem>>, vector<8x128xf32>
    tpu.vector_store %arg14[%c0_45, %c0_46], %94 {strides = array<i32>} : memref<8x128xf32, #tpu.memory_space<vmem>>, vector<8x128xf32>,
    return
  }
}

</mosaic_0001>

<llo_original>
// kernel: transformer_block_forward.1
$region0: #{transformer_block_forward.1}
  #allocation0 [shape = 'u32[]', space=smem, size = 0x4, offset = 0x4, fixed_abs, tag = 'smem constant byte address 0x4 - core index']
  #allocation1 [shape = 'u32[144,128]{1,0:T(1,128)}', space=vmem, size = 0x12000, scoped, tag = 'internal scratch']
  %s0 = inlined_call_operand.vmem [shape: f32[8,128], index: 0, kind: input, shape index: {}]
  %s1 = inlined_call_operand.vmem [shape: f32[8,8], index: 1, kind: input, shape index: {}]
  %s2 = inlined_call_operand.vmem [shape: f32[128,384], index: 2, kind: input, shape index: {}]
  %s3 = inlined_call_operand.vmem [shape: f32[1,384], index: 3, kind: input, shape index: {}]
  %s4 = inlined_call_operand.vmem [shape: f32[128,128], index: 4, kind: input, shape index: {}]
  %s5 = inlined_call_operand.vmem [shape: f32[1,128], index: 5, kind: input, shape index: {}]
  %s6 = inlined_call_operand.vmem [shape: f32[1,128], index: 6, kind: input, shape index: {}]
  %s7 = inlined_call_operand.vmem [shape: f32[1,128], index: 7, kind: input, shape index: {}]
  %s8 = inlined_call_operand.vmem [shape: f32[128,256], index: 8, kind: input, shape index: {}]
  %s9 = inlined_call_operand.vmem [shape: f32[1,256], index: 9, kind: input, shape index: {}]
  %s10 = inlined_call_operand.vmem [shape: f32[256,128], index: 10, kind: input, shape index: {}]
  %s11 = inlined_call_operand.vmem [shape: f32[1,128], index: 11, kind: input, shape index: {}]
  %s12 = inlined_call_operand.vmem [shape: f32[1,128], index: 12, kind: input, shape index: {}]
  %s13 = inlined_call_operand.vmem [shape: f32[1,128], index: 13, kind: input, shape index: {}]
  %s14 = inlined_call_operand.hbm [shape: f32[8,128], index: 14, kind: output, shape index: {}]
  %s15 = sld [smem:[#allocation0]]
  $region66: #{transformer_block_forward.1} parent=0
    _
  %s17 = ssub.s32 1, %s15
  %s18 = scalar_select 0, %s17, %s15
  $region1: #{transformer_block_forward.1} parent=0
    #allocation2 [shape = 'u8[4096]{0}', space=vmem, size = 0x1000, scoped, tag = 'output window, operand 0, single buffered']
    #allocation3 [shape = 's32[1]{0}', space=sflag, size = 0x4, scoped, tag = 'scoped memory for transformer_block_forward.1']
    %19 = vsyncpa [#allocation3], 0
    // Predicated region
    $region2: #{transformer_block_forward.1} parent=1 // pred_check
      _
    $region3: #{transformer_block_forward.1} parent=1 // pred_check_branch
      %21 = sbr.rel (0) target = $region5
    $region4: #{transformer_block_forward.1} parent=1 // pred_region
      _
    $region5: #{transformer_block_forward.1} parent=1 // pred_fallthru
      _
    // Predicated region
    $region6: #{transformer_block_forward.1} parent=1 // pred_check
      _
    $region7: #{transformer_block_forward.1} parent=1 // pred_check_branch
      %23 = sbr.rel (0) target = $region9
    $region8: #{transformer_block_forward.1} parent=1 // pred_region
      _
    $region9: #{transformer_block_forward.1} parent=1 // pred_fallthru
      _
    // Predicated region
    $region10: #{transformer_block_forward.1} parent=1 // pred_check
      _
    $region11: #{transformer_block_forward.1} parent=1 // pred_check_branch
      %25 = sbr.rel (0) target = $region13
    $region12: #{transformer_block_forward.1} parent=1 // pred_region
      _
    $region13: #{transformer_block_forward.1} parent=1 // pred_fallthru
      _
    // Predicated region
    $region14: #{transformer_block_forward.1} parent=1 // pred_check
      _
    $region15: #{transformer_block_forward.1} parent=1 // pred_check_branch
      %27 = sbr.rel (0) target = $region17
    $region16: #{transformer_block_forward.1} parent=1 // pred_region
      _
    $region17: #{transformer_block_forward.1} parent=1 // pred_fallthru
      _
    // Predicated region
    $region18: #{transformer_block_forward.1} parent=1 // pred_check
      _
    $region19: #{transformer_block_forward.1} parent=1 // pred_check_branch
      %29 = sbr.rel (0) target = $region21
    $region20: #{transformer_block_forward.1} parent=1 // pred_region
      _
    $region21: #{transformer_block_forward.1} parent=1 // pred_fallthru
      _
    // Predicated region
    $region22: #{transformer_block_forward.1} parent=1 // pred_check
      _
    $region23: #{transformer_block_forward.1} parent=1 // pred_check_branch
      %31 = sbr.rel (0) target = $region25
    $region24: #{transformer_block_forward.1} parent=1 // pred_region
      _
    $region25: #{transformer_block_forward.1} parent=1 // pred_fallthru
      _
    // Predicated region
    $region26: #{transformer_block_forward.1} parent=1 // pred_check
      _
    $region27: #{transformer_block_forward.1} parent=1 // pred_check_branch
      %33 = sbr.rel (0) target = $region29
    $region28: #{transformer_block_forward.1} parent=1 // pred_region
      _
    $region29: #{transformer_block_forward.1} parent=1 // pred_fallthru
      _
    // Predicated region
    $region30: #{transformer_block_forward.1} parent=1 // pred_check
      _
    $region31: #{transformer_block_forward.1} parent=1 // pred_check_branch
      %35 = sbr.rel (0) target = $region33
    $region32: #{transformer_block_forward.1} parent=1 // pred_region
      _
    $region33: #{transformer_block_forward.1} parent=1 // pred_fallthru
      _
    // Predicated region
    $region34: #{transformer_block_forward.1} parent=1 // pred_check
      _
    $region35: #{transformer_block_forward.1} parent=1 // pred_check_branch
      %37 = sbr.rel (0) target = $region37
    $region36: #{transformer_block_forward.1} parent=1 // pred_region
      _
    $region37: #{transformer_block_forward.1} parent=1 // pred_fallthru
      _
    // Predicated region
    $region38: #{transformer_block_forward.1} parent=1 // pred_check
      _
    $region39: #{transformer_block_forward.1} parent=1 // pred_check_branch
      %39 = sbr.rel (0) target = $region41
    $region40: #{transformer_block_forward.1} parent=1 // pred_region
      _
    $region41: #{transformer_block_forward.1} parent=1 // pred_fallthru
      _
    // Predicated region
    $region42: #{transformer_block_forward.1} parent=1 // pred_check
      _
    $region43: #{transformer_block_forward.1} parent=1 // pred_check_branch
      %41 = sbr.rel (0) target = $region45
    $region44: #{transformer_block_forward.1} parent=1 // pred_region
      _
    $region45: #{transformer_block_forward.1} parent=1 // pred_fallthru
      _
    // Predicated region
    $region46: #{transformer_block_forward.1} parent=1 // pred_check
      _
    $region47: #{transformer_block_forward.1} parent=1 // pred_check_branch
      %43 = sbr.rel (0) target = $region49
    $region48: #{transformer_block_forward.1} parent=1 // pred_region
      _
    $region49: #{transformer_block_forward.1} parent=1 // pred_fallthru
      _
    // Predicated region
    $region50: #{transformer_block_forward.1} parent=1 // pred_check
      _
    $region51: #{transformer_block_forward.1} parent=1 // pred_check_branch
      %45 = sbr.rel (0) target = $region53
    $region52: #{transformer_block_forward.1} parent=1 // pred_region
      _
    $region53: #{transformer_block_forward.1} parent=1 // pred_fallthru
      _
    // Predicated region
    $region54: #{transformer_block_forward.1} parent=1 // pred_check
      _
    $region55: #{transformer_block_forward.1} parent=1 // pred_check_branch
      %47 = sbr.rel (0) target = $region57
    $region56: #{transformer_block_forward.1} parent=1 // pred_region
      _
    $region57: #{transformer_block_forward.1} parent=1 // pred_fallthru
      _
    %v48 = vld [vmem:[%s0] sm:$0xff]
    %v49 = vlaneseq
    %v50 = vand.u32 %v49, 127
    %vm51 = vcmp.lt.s32.totalorder %v50, 81
    %v52 = vsel %vm51, 1, 0
    %v53 = vcvt.s32.f32 %v52
    %v54 = vld [vmem:[%s2] sm:$0xff]
    %v55 = vld [vmem:[%s2 + $0x8] sm:$0xff]
    %v56 = vld [vmem:[%s2 + $0x10] sm:$0xff]
    %v57 = vld [vmem:[%s2 + $0x18] sm:$0xff]
    %v58 = vld [vmem:[%s2 + $0x20] sm:$0xff]
    %v59 = vld [vmem:[%s2 + $0x28] sm:$0xff]
    %v60 = vld [vmem:[%s2 + $0x30] sm:$0xff]
    %v61 = vld [vmem:[%s2 + $0x38] sm:$0xff]
    %v62 = vld [vmem:[%s2 + $0x40] sm:$0xff]
    %v63 = vld [vmem:[%s2 + $0x48] sm:$0xff]
    %v64 = vld [vmem:[%s2 + $0x50] sm:$0xff]
    %v65 = vld [vmem:[%s2 + $0x58] sm:$0xff]
    %v66 = vld [vmem:[%s2 + $0x60] sm:$0xff]
    %v67 = vld [vmem:[%s2 + $0x68] sm:$0xff]
    %v68 = vld [vmem:[%s2 + $0x70] sm:$0xff]
    %v69 = vld [vmem:[%s2 + $0x78] sm:$0xff]
    %v70 = vld [vmem:[%s2 + $0x80] sm:$0xff]
    %v71 = vld [vmem:[%s2 + $0x88] sm:$0xff]
    %v72 = vld [vmem:[%s2 + $0x90] sm:$0xff]
    %v73 = vld [vmem:[%s2 + $0x98] sm:$0xff]
    %v74 = vld [vmem:[%s2 + $0xa0] sm:$0xff]
    %v75 = vld [vmem:[%s2 + $0xa8] sm:$0xff]
    %v76 = vld [vmem:[%s2 + $0xb0] sm:$0xff]
    %v77 = vld [vmem:[%s2 + $0xb8] sm:$0xff]
    %v78 = vld [vmem:[%s2 + $0xc0] sm:$0xff]
    %v79 = vld [vmem:[%s2 + $0xc8] sm:$0xff]
    %v80 = vld [vmem:[%s2 + $0xd0] sm:$0xff]
    %v81 = vld [vmem:[%s2 + $0xd8] sm:$0xff]
    %v82 = vld [vmem:[%s2 + $0xe0] sm:$0xff]
    %v83 = vld [vmem:[%s2 + $0xe8] sm:$0xff]
    %v84 = vld [vmem:[%s2 + $0xf0] sm:$0xff]
    %v85 = vld [vmem:[%s2 + $0xf8] sm:$0xff]
    %v86 = vld [vmem:[%s2 + $0x100] sm:$0xff]
    %v87 = vld [vmem:[%s2 + $0x108] sm:$0xff]
    %v88 = vld [vmem:[%s2 + $0x110] sm:$0xff]
    %v89 = vld [vmem:[%s2 + $0x118] sm:$0xff]
    %v90 = vld [vmem:[%s2 + $0x120] sm:$0xff]
    %v91 = vld [vmem:[%s2 + $0x128] sm:$0xff]
    %v92 = vld [vmem:[%s2 + $0x130] sm:$0xff]
    %v93 = vld [vmem:[%s2 + $0x138] sm:$0xff]
    %v94 = vld [vmem:[%s2 + $0x140] sm:$0xff]
    %v95 = vld [vmem:[%s2 + $0x148] sm:$0xff]
    %v96 = vld [vmem:[%s2 + $0x150] sm:$0xff]
    %v97 = vld [vmem:[%s2 + $0x158] sm:$0xff]
    %v98 = vld [vmem:[%s2 + $0x160] sm:$0xff]
    %v99 = vld [vmem:[%s2 + $0x168] sm:$0xff]
    %v100 = vld [vmem:[%s2 + $0x170] sm:$0xff]
    %v101 = vld [vmem:[%s2 + $0x178] sm:$0xff]
    %v102 = vld [vmem:[%s3] sm:$0x7]
    %v104 = vlaneseq
    %v105 = vshrl.u32 %v104, 7
    %v106 = vsub.s32 0, %v105
    %v107 = vrot.slane %v102, %v106
    %v108 = vlaneseq
    %v109 = vshrl.u32 %v108, 7
    %v110 = vsub.s32 1, %v109
    %v111 = vrot.slane %v102, %v110
    %v112 = vlaneseq
    %v113 = vshrl.u32 %v112, 7
    %v114 = vsub.s32 2, %v113
    %v115 = vrot.slane %v102, %v114
    %119 = vmatprep.subr.mxu0 %v55
    %120 = vmatpush1.msra.mxu0 %v54
    %121 = vmatprep.subr.mxu0 %v58
    %122 = vmatpush1.msra.mxu0 %v57
    %123 = vmatprep.subr.mxu0 %v61
    %124 = vmatpush1.msra.mxu0 %v60
    %125 = vmatprep.subr.mxu0 %v64
    %126 = vmatpush1.msra.mxu0 %v63
    %127 = vmatprep.subr.mxu0 %v67
    %128 = vmatpush1.msra.mxu0 %v66
    %129 = vmatprep.subr.mxu0 %v70
    %130 = vmatpush1.msra.mxu0 %v69
    %131 = vmatprep.subr.mxu0 %v73
    %132 = vmatpush1.msra.mxu0 %v72
    %133 = vmatprep.subr.mxu0 %v76
    %134 = vmatpush1.msra.mxu0 %v75
    %135 = vmatprep.subr.mxu0 %v79
    %136 = vmatpush1.msra.mxu0 %v78
    %137 = vmatprep.subr.mxu0 %v82
    %138 = vmatpush1.msra.mxu0 %v81
    %139 = vmatprep.subr.mxu0 %v85
    %140 = vmatpush1.msra.mxu0 %v84
    %141 = vmatprep.subr.mxu0 %v88
    %142 = vmatpush1.msra.mxu0 %v87
    %143 = vmatprep.subr.mxu0 %v91
    %144 = vmatpush1.msra.mxu0 %v90
    %145 = vmatprep.subr.mxu0 %v94
    %146 = vmatpush1.msra.mxu0 %v93
    %147 = vmatprep.subr.mxu0 %v97
    %148 = vmatpush1.msra.mxu0 %v96
    %149 = vmatprep.subr.mxu0 %v100
    %150 = vmatpush1.msra.mxu0 %v99
    %151 = vmatprep.subr.mxu0 0.0
    %152 = vmatpush1.msra.mxu0 0.0
    %153 = vmatprep.subr.mxu0 0.0
    %154 = vmatpush1.msra.mxu0 0.0
    %155 = vmatprep.subr.mxu0 0.0
    %156 = vmatpush1.msra.mxu0 0.0
    %157 = vmatprep.subr.mxu0 0.0
    %158 = vmatpush1.msra.mxu0 0.0
    %159 = vmatprep.subr.mxu0 0.0
    %160 = vmatpush1.msra.mxu0 0.0
    %161 = vmatprep.subr.mxu0 0.0
    %162 = vmatpush1.msra.mxu0 0.0
    %163 = vmatprep.subr.mxu0 0.0
    %164 = vmatpush1.msra.mxu0 0.0
    %165 = vmatprep.subr.mxu0 0.0
    %166 = vmatpush1.msra.mxu0 0.0
    %167 = vmatprep.subr.mxu0 0.0
    %168 = vmatpush1.msra.mxu0 0.0
    %169 = vmatprep.subr.mxu0 0.0
    %170 = vmatpush1.msra.mxu0 0.0
    %171 = vmatprep.subr.mxu0 0.0
    %172 = vmatpush1.msra.mxu0 0.0
    %173 = vmatprep.subr.mxu0 0.0
    %174 = vmatpush1.msra.mxu0 0.0
    %175 = vmatprep.subr.mxu0 0.0
    %176 = vmatpush1.msra.mxu0 0.0
    %177 = vmatprep.subr.mxu0 0.0
    %178 = vmatpush1.msra.mxu0 0.0
    %179 = vmatprep.subr.mxu0 0.0
    %180 = vmatpush1.msra.mxu0 0.0
    %181 = vmatprep.subr.mxu0 0.0
    %182 = vmatpush1.msra.mxu0 0.0
    %183 = vmatprep.mubr.f32.mxu0 0.0
    %184 = vmatmul.mubr.f32.gmra.mrb[0].mxu0 %v48
    %v185 = vpop.f32.mrb[0].mxu0
    %v186 = vadd.f32 %v107, %v185
    %v187 = vpop.f32.mrb[0].mxu0
    %v188 = vadd.f32 %v111, %v187
    %189 = vdwg.mxu0
    %190 = vmatprep.subr.mxu0 0.0
    %191 = vmatpush1.msra.mxu0 %v56
    %192 = vmatprep.subr.mxu0 0.0
    %193 = vmatpush1.msra.mxu0 %v59
    %194 = vmatprep.subr.mxu0 0.0
    %195 = vmatpush1.msra.mxu0 %v62
    %196 = vmatprep.subr.mxu0 0.0
    %197 = vmatpush1.msra.mxu0 %v65
    %198 = vmatprep.subr.mxu0 0.0
    %199 = vmatpush1.msra.mxu0 %v68
    %200 = vmatprep.subr.mxu0 0.0
    %201 = vmatpush1.msra.mxu0 %v71
    %202 = vmatprep.subr.mxu0 0.0
    %203 = vmatpush1.msra.mxu0 %v74
    %204 = vmatprep.subr.mxu0 0.0
    %205 = vmatpush1.msra.mxu0 %v77
    %206 = vmatprep.subr.mxu0 0.0
    %207 = vmatpush1.msra.mxu0 %v80
    %208 = vmatprep.subr.mxu0 0.0
    %209 = vmatpush1.msra.mxu0 %v83
    %210 = vmatprep.subr.mxu0 0.0
    %211 = vmatpush1.msra.mxu0 %v86
    %212 = vmatprep.subr.mxu0 0.0
    %213 = vmatpush1.msra.mxu0 %v89
    %214 = vmatprep.subr.mxu0 0.0
    %215 = vmatpush1.msra.mxu0 %v92
    %216 = vmatprep.subr.mxu0 0.0
    %217 = vmatpush1.msra.mxu0 %v95
    %218 = vmatprep.subr.mxu0 0.0
    %219 = vmatpush1.msra.mxu0 %v98
    %220 = vmatprep.subr.mxu0 0.0
    %221 = vmatpush1.msra.mxu0 %v101
    %222 = vmatprep.subr.mxu0 0.0
    %223 = vmatpush1.msra.mxu0 0.0
    %224 = vmatprep.subr.mxu0 0.0
    %225 = vmatpush1.msra.mxu0 0.0
    %226 = vmatprep.subr.mxu0 0.0
    %227 = vmatpush1.msra.mxu0 0.0
    %228 = vmatprep.subr.mxu0 0.0
    %229 = vmatpush1.msra.mxu0 0.0
    %230 = vmatprep.subr.mxu0 0.0
    %231 = vmatpush1.msra.mxu0 0.0
    %232 = vmatprep.subr.mxu0 0.0
    %233 = vmatpush1.msra.mxu0 0.0
    %234 = vmatprep.subr.mxu0 0.0
    %235 = vmatpush1.msra.mxu0 0.0
    %236 = vmatprep.subr.mxu0 0.0
    %237 = vmatpush1.msra.mxu0 0.0
    %238 = vmatprep.subr.mxu0 0.0
    %239 = vmatpush1.msra.mxu0 0.0
    %240 = vmatprep.subr.mxu0 0.0
    %241 = vmatpush1.msra.mxu0 0.0
    %242 = vmatprep.subr.mxu0 0.0
    %243 = vmatpush1.msra.mxu0 0.0
    %244 = vmatprep.subr.mxu0 0.0
    %245 = vmatpush1.msra.mxu0 0.0
    %246 = vmatprep.subr.mxu0 0.0
    %247 = vmatpush1.msra.mxu0 0.0
    %248 = vmatprep.subr.mxu0 0.0
    %249 = vmatpush1.msra.mxu0 0.0
    %250 = vmatprep.subr.mxu0 0.0
    %251 = vmatpush1.msra.mxu0 0.0
    %252 = vmatprep.subr.mxu0 0.0
    %253 = vmatpush1.msra.mxu0 0.0
    %254 = vmatprep.mubr.f32.mxu0 0.0
    %255 = vmatmul.mubr.f32.gmra.mrb[0].mxu0 %v48
    %v256 = vpop.f32.mrb[0].mxu0
    %v257 = vadd.f32 %v115, %v256
    %v258 = vpop.f32.mrb[0].mxu0
    %259 = vdwg.mxu0
    %v260 = vld [vmem:[%s1] sm:$0xff]
    %261 = vmatprep.subr.mxu0 0.0
    %262 = vmatpush1.xpose.msra.mxu0 %v188
    %263 = vmatprep.subr.mxu0 0.0
    %264 = vmatpush1.xpose.msra.mxu0 0.0
    %265 = vmatprep.subr.mxu0 0.0
    %266 = vmatpush1.xpose.msra.mxu0 0.0
    %267 = vmatprep.subr.mxu0 0.0
    %268 = vmatpush1.xpose.msra.mxu0 0.0
    %269 = vmatprep.subr.mxu0 0.0
    %270 = vmatpush1.xpose.msra.mxu0 0.0
    %271 = vmatprep.subr.mxu0 0.0
    %272 = vmatpush1.xpose.msra.mxu0 0.0
    %273 = vmatprep.subr.mxu0 0.0
    %274 = vmatpush1.xpose.msra.mxu0 0.0
    %275 = vmatprep.subr.mxu0 0.0
    %276 = vmatpush1.xpose.msra.mxu0 0.0
    %277 = vmatprep.subr.mxu0 0.0
    %278 = vmatpush1.xpose.msra.mxu0 0.0
    %279 = vmatprep.subr.mxu0 0.0
    %280 = vmatpush1.xpose.msra.mxu0 0.0
    %281 = vmatprep.subr.mxu0 0.0
    %282 = vmatpush1.xpose.msra.mxu0 0.0
    %283 = vmatprep.subr.mxu0 0.0
    %284 = vmatpush1.xpose.msra.mxu0 0.0
    %285 = vmatprep.subr.mxu0 0.0
    %286 = vmatpush1.xpose.msra.mxu0 0.0
    %287 = vmatprep.subr.mxu0 0.0
    %288 = vmatpush1.xpose.msra.mxu0 0.0
    %289 = vmatprep.subr.mxu0 0.0
    %290 = vmatpush1.xpose.msra.mxu0 0.0
    %291 = vmatprep.subr.mxu0 0.0
    %292 = vmatpush1.xpose.msra.mxu0 0.0
    %293 = vmatprep.subr.mxu0 0.0
    %294 = vmatpush1.xpose.msra.mxu0 0.0
    %295 = vmatprep.subr.mxu0 0.0
    %296 = vmatpush1.xpose.msra.mxu0 0.0
    %297 = vmatprep.subr.mxu0 0.0
    %298 = vmatpush1.xpose.msra.mxu0 0.0
    %299 = vmatprep.subr.mxu0 0.0
    %300 = vmatpush1.xpose.msra.mxu0 0.0
    %301 = vmatprep.subr.mxu0 0.0
    %302 = vmatpush1.xpose.msra.mxu0 0.0
    %303 = vmatprep.subr.mxu0 0.0
    %304 = vmatpush1.xpose.msra.mxu0 0.0
    %305 = vmatprep.subr.mxu0 0.0
    %306 = vmatpush1.xpose.msra.mxu0 0.0
    %307 = vmatprep.subr.mxu0 0.0
    %308 = vmatpush1.xpose.msra.mxu0 0.0
    %309 = vmatprep.subr.mxu0 0.0
    %310 = vmatpush1.xpose.msra.mxu0 0.0
    %311 = vmatprep.subr.mxu0 0.0
    %312 = vmatpush1.xpose.msra.mxu0 0.0
    %313 = vmatprep.subr.mxu0 0.0
    %314 = vmatpush1.xpose.msra.mxu0 0.0
    %315 = vmatprep.subr.mxu0 0.0
    %316 = vmatpush1.xpose.msra.mxu0 0.0
    %317 = vmatprep.subr.mxu0 0.0
    %318 = vmatpush1.xpose.msra.mxu0 0.0
    %319 = vmatprep.subr.mxu0 0.0
    %320 = vmatpush1.xpose.msra.mxu0 0.0
    %321 = vmatprep.subr.mxu0 0.0
    %322 = vmatpush1.xpose.msra.mxu0 0.0
    %323 = vmatprep.subr.mxu0 0.0
    %324 = vmatpush1.xpose.msra.mxu0 0.0
    %325 = vmatprep.mubr.f32.mxu0 0.0
    %326 = vmatmul.mubr.f32.gmra.mrb[0].mxu0 %v186
    %v327 = vpop.f32.mrb[0].mxu0
    %v328 = vadd.f32 %v260, %v327
    %v329 = vpop.f32.mrb[0].mxu0
    %330 = vdwg.mxu0
    %vm331 = vcmask 64512
    %v332 = vsel %vm331, %v328, -inf
    %333 = vmax.xlane.f32.xlu0 %v332
    %v334 = vpop.xlane.xlu0 %333
    %v335 = vsub.f32 %v328, %v334
    %v336 = vmul.f32 %v335, 1.442695
    %v337 = vpow.pop %v336
    %v338 = vsel %vm331, %v337, 0.0
    %339 = vadd.xlane.f32.xlu0 %v338
    %v340 = vpop.xlane.xlu0 %339
    %v341 = vrcp.pop %v340
    %v342 = vmul.f32 %v337, %v341
    %v344 = vsel %vm331, %v342, 0
    %346 = vmatprep.subr.mxu0 0.0
    %347 = vmatpush1.msra.mxu0 %v257
    %348 = vmatprep.subr.mxu0 0.0
    %349 = vmatpush1.msra.mxu0 0.0
    %350 = vmatprep.subr.mxu0 0.0
    %351 = vmatpush1.msra.mxu0 0.0
    %352 = vmatprep.subr.mxu0 0.0
    %353 = vmatpush1.msra.mxu0 0.0
    %354 = vmatprep.subr.mxu0 0.0
    %355 = vmatpush1.msra.mxu0 0.0
    %356 = vmatprep.subr.mxu0 0.0
    %357 = vmatpush1.msra.mxu0 0.0
    %358 = vmatprep.subr.mxu0 0.0
    %359 = vmatpush1.msra.mxu0 0.0
    %360 = vmatprep.subr.mxu0 0.0
    %361 = vmatpush1.msra.mxu0 0.0
    %362 = vmatprep.subr.mxu0 0.0
    %363 = vmatpush1.msra.mxu0 0.0
    %364 = vmatprep.subr.mxu0 0.0
    %365 = vmatpush1.msra.mxu0 0.0
    %366 = vmatprep.subr.mxu0 0.0
    %367 = vmatpush1.msra.mxu0 0.0
    %368 = vmatprep.subr.mxu0 0.0
    %369 = vmatpush1.msra.mxu0 0.0
    %370 = vmatprep.subr.mxu0 0.0
    %371 = vmatpush1.msra.mxu0 0.0
    %372 = vmatprep.subr.mxu0 0.0
    %373 = vmatpush1.msra.mxu0 0.0
    %374 = vmatprep.subr.mxu0 0.0
    %375 = vmatpush1.msra.mxu0 0.0
    %376 = vmatprep.subr.mxu0 0.0
    %377 = vmatpush1.msra.mxu0 0.0
    %378 = vmatprep.subr.mxu0 0.0
    %379 = vmatpush1.msra.mxu0 0.0
    %380 = vmatprep.subr.mxu0 0.0
    %381 = vmatpush1.msra.mxu0 0.0
    %382 = vmatprep.subr.mxu0 0.0
    %383 = vmatpush1.msra.mxu0 0.0
    %384 = vmatprep.subr.mxu0 0.0
    %385 = vmatpush1.msra.mxu0 0.0
    %386 = vmatprep.subr.mxu0 0.0
    %387 = vmatpush1.msra.mxu0 0.0
    %388 = vmatprep.subr.mxu0 0.0
    %389 = vmatpush1.msra.mxu0 0.0
    %390 = vmatprep.subr.mxu0 0.0
    %391 = vmatpush1.msra.mxu0 0.0
    %392 = vmatprep.subr.mxu0 0.0
    %393 = vmatpush1.msra.mxu0 0.0
    %394 = vmatprep.subr.mxu0 0.0
    %395 = vmatpush1.msra.mxu0 0.0
    %396 = vmatprep.subr.mxu0 0.0
    %397 = vmatpush1.msra.mxu0 0.0
    %398 = vmatprep.subr.mxu0 0.0
    %399 = vmatpush1.msra.mxu0 0.0
    %400 = vmatprep.subr.mxu0 0.0
    %401 = vmatpush1.msra.mxu0 0.0
    %402 = vmatprep.subr.mxu0 0.0
    %403 = vmatpush1.msra.mxu0 0.0
    %404 = vmatprep.subr.mxu0 0.0
    %405 = vmatpush1.msra.mxu0 0.0
    %406 = vmatprep.subr.mxu0 0.0
    %407 = vmatpush1.msra.mxu0 0.0
    %408 = vmatprep.subr.mxu0 0.0
    %409 = vmatpush1.msra.mxu0 0.0
    %410 = vmatprep.mubr.f32.mxu0 0.0
    %411 = vmatmul.mubr.f32.gmra.mrb[0].mxu0 %v344
    %v412 = vpop.f32.mrb[0].mxu0
    %v413 = vadd.f32 0.0, %v412
    %v414 = vpop.f32.mrb[0].mxu0
    %415 = vdwg.mxu0
    %v416 = vld [vmem:[%s4] sm:$0xff]
    %v417 = vld [vmem:[%s4 + $0x8] sm:$0xff]
    %v418 = vld [vmem:[%s4 + $0x10] sm:$0xff]
    %v419 = vld [vmem:[%s4 + $0x18] sm:$0xff]
    %v420 = vld [vmem:[%s4 + $0x20] sm:$0xff]
    %v421 = vld [vmem:[%s4 + $0x28] sm:$0xff]
    %v422 = vld [vmem:[%s4 + $0x30] sm:$0xff]
    %v423 = vld [vmem:[%s4 + $0x38] sm:$0xff]
    %v424 = vld [vmem:[%s4 + $0x40] sm:$0xff]
    %v425 = vld [vmem:[%s4 + $0x48] sm:$0xff]
    %v426 = vld [vmem:[%s4 + $0x50] sm:$0xff]
    %v427 = vld [vmem:[%s4 + $0x58] sm:$0xff]
    %v428 = vld [vmem:[%s4 + $0x60] sm:$0xff]
    %v429 = vld [vmem:[%s4 + $0x68] sm:$0xff]
    %v430 = vld [vmem:[%s4 + $0x70] sm:$0xff]
    %v431 = vld [vmem:[%s4 + $0x78] sm:$0xff]
    %v432 = vld [vmem:[%s5] sm:$0x1]
    %v434 = vlaneseq
    %v435 = vshrl.u32 %v434, 7
    %v436 = vsub.s32 0, %v435
    %v437 = vrot.slane %v432, %v436
    %439 = vmatprep.subr.mxu0 0.0
    %440 = vmatpush1.msra.mxu0 %v416
    %441 = vmatprep.subr.mxu0 0.0
    %442 = vmatpush1.msra.mxu0 %v417
    %443 = vmatprep.subr.mxu0 0.0
    %444 = vmatpush1.msra.mxu0 %v418
    %445 = vmatprep.subr.mxu0 0.0
    %446 = vmatpush1.msra.mxu0 %v419
    %447 = vmatprep.subr.mxu0 0.0
    %448 = vmatpush1.msra.mxu0 %v420
    %449 = vmatprep.subr.mxu0 0.0
    %450 = vmatpush1.msra.mxu0 %v421
    %451 = vmatprep.subr.mxu0 0.0
    %452 = vmatpush1.msra.mxu0 %v422
    %453 = vmatprep.subr.mxu0 0.0
    %454 = vmatpush1.msra.mxu0 %v423
    %455 = vmatprep.subr.mxu0 0.0
    %456 = vmatpush1.msra.mxu0 %v424
    %457 = vmatprep.subr.mxu0 0.0
    %458 = vmatpush1.msra.mxu0 %v425
    %459 = vmatprep.subr.mxu0 0.0
    %460 = vmatpush1.msra.mxu0 %v426
    %461 = vmatprep.subr.mxu0 0.0
    %462 = vmatpush1.msra.mxu0 %v427
    %463 = vmatprep.subr.mxu0 0.0
    %464 = vmatpush1.msra.mxu0 %v428
    %465 = vmatprep.subr.mxu0 0.0
    %466 = vmatpush1.msra.mxu0 %v429
    %467 = vmatprep.subr.mxu0 0.0
    %468 = vmatpush1.msra.mxu0 %v430
    %469 = vmatprep.subr.mxu0 0.0
    %470 = vmatpush1.msra.mxu0 %v431
    %471 = vmatprep.subr.mxu0 0.0
    %472 = vmatpush1.msra.mxu0 0.0
    %473 = vmatprep.subr.mxu0 0.0
    %474 = vmatpush1.msra.mxu0 0.0
    %475 = vmatprep.subr.mxu0 0.0
    %476 = vmatpush1.msra.mxu0 0.0
    %477 = vmatprep.subr.mxu0 0.0
    %478 = vmatpush1.msra.mxu0 0.0
    %479 = vmatprep.subr.mxu0 0.0
    %480 = vmatpush1.msra.mxu0 0.0
    %481 = vmatprep.subr.mxu0 0.0
    %482 = vmatpush1.msra.mxu0 0.0
    %483 = vmatprep.subr.mxu0 0.0
    %484 = vmatpush1.msra.mxu0 0.0
    %485 = vmatprep.subr.mxu0 0.0
    %486 = vmatpush1.msra.mxu0 0.0
    %487 = vmatprep.subr.mxu0 0.0
    %488 = vmatpush1.msra.mxu0 0.0
    %489 = vmatprep.subr.mxu0 0.0
    %490 = vmatpush1.msra.mxu0 0.0
    %491 = vmatprep.subr.mxu0 0.0
    %492 = vmatpush1.msra.mxu0 0.0
    %493 = vmatprep.subr.mxu0 0.0
    %494 = vmatpush1.msra.mxu0 0.0
    %495 = vmatprep.subr.mxu0 0.0
    %496 = vmatpush1.msra.mxu0 0.0
    %497 = vmatprep.subr.mxu0 0.0
    %498 = vmatpush1.msra.mxu0 0.0
    %499 = vmatprep.subr.mxu0 0.0
    %500 = vmatpush1.msra.mxu0 0.0
    %501 = vmatprep.subr.mxu0 0.0
    %502 = vmatpush1.msra.mxu0 0.0
    %503 = vmatprep.mubr.f32.mxu0 0.0
    %504 = vmatmul.mubr.f32.gmra.mrb[0].mxu0 %v413
    %v505 = vpop.f32.mrb[0].mxu0
    %v506 = vadd.f32 %v437, %v505
    %v507 = vpop.f32.mrb[0].mxu0
    %508 = vdwg.mxu0
    %v509 = vadd.f32 %v48, %v506
    %v510 = vld [vmem:[%s6] sm:$0x1]
    %v511 = vld [vmem:[%s7] sm:$0x1]
    %512 = vadd.xlane.f32.xlu0 %v509
    %v513 = vpop.xlane.xlu0 %512
    %v514 = vmul.f32 %v513, 0.012345679
    %v515 = vsub.f32 %v509, %v514
    %v516 = vmul.f32 %v515, %v53
    %v517 = vmul.f32 %v516, %v516
    %518 = vadd.xlane.f32.xlu0 %v517
    %v519 = vpop.xlane.xlu0 %518
    %v520 = vmul.f32 %v519, 0.012345679
    %v521 = vadd.f32 %v520, 1e-05
    %v522 = vrsqrt.pop %v521
    %v523 = vmul.f32 %v516, %v522
    %v525 = vlaneseq
    %v526 = vshrl.u32 %v525, 7
    %v527 = vsub.s32 0, %v526
    %v528 = vrot.slane %v510, %v527
    %v530 = vmul.f32 %v523, %v528
    %v532 = vlaneseq
    %v533 = vshrl.u32 %v532, 7
    %v534 = vsub.s32 0, %v533
    %v535 = vrot.slane %v511, %v534
    %v537 = vadd.f32 %v530, %v535
    %v538 = vld [vmem:[%s8] sm:$0xff]
    %v539 = vld [vmem:[%s8 + $0x8] sm:$0xff]
    %v540 = vld [vmem:[%s8 + $0x10] sm:$0xff]
    %v541 = vld [vmem:[%s8 + $0x18] sm:$0xff]
    %v542 = vld [vmem:[%s8 + $0x20] sm:$0xff]
    %v543 = vld [vmem:[%s8 + $0x28] sm:$0xff]
    %v544 = vld [vmem:[%s8 + $0x30] sm:$0xff]
    %v545 = vld [vmem:[%s8 + $0x38] sm:$0xff]
    %v546 = vld [vmem:[%s8 + $0x40] sm:$0xff]
    %v547 = vld [vmem:[%s8 + $0x48] sm:$0xff]
    %v548 = vld [vmem:[%s8 + $0x50] sm:$0xff]
    %v549 = vld [vmem:[%s8 + $0x58] sm:$0xff]
    %v550 = vld [vmem:[%s8 + $0x60] sm:$0xff]
    %v551 = vld [vmem:[%s8 + $0x68] sm:$0xff]
    %v552 = vld [vmem:[%s8 + $0x70] sm:$0xff]
    %v553 = vld [vmem:[%s8 + $0x78] sm:$0xff]
    %v554 = vld [vmem:[%s8 + $0x80] sm:$0xff]
    %v555 = vld [vmem:[%s8 + $0x88] sm:$0xff]
    %v556 = vld [vmem:[%s8 + $0x90] sm:$0xff]
    %v557 = vld [vmem:[%s8 + $0x98] sm:$0xff]
    %v558 = vld [vmem:[%s8 + $0xa0] sm:$0xff]
    %v559 = vld [vmem:[%s8 + $0xa8] sm:$0xff]
    %v560 = vld [vmem:[%s8 + $0xb0] sm:$0xff]
    %v561 = vld [vmem:[%s8 + $0xb8] sm:$0xff]
    %v562 = vld [vmem:[%s8 + $0xc0] sm:$0xff]
    %v563 = vld [vmem:[%s8 + $0xc8] sm:$0xff]
    %v564 = vld [vmem:[%s8 + $0xd0] sm:$0xff]
    %v565 = vld [vmem:[%s8 + $0xd8] sm:$0xff]
    %v566 = vld [vmem:[%s8 + $0xe0] sm:$0xff]
    %v567 = vld [vmem:[%s8 + $0xe8] sm:$0xff]
    %v568 = vld [vmem:[%s8 + $0xf0] sm:$0xff]
    %v569 = vld [vmem:[%s8 + $0xf8] sm:$0xff]
    %v570 = vld [vmem:[%s9] sm:$0x3]
    %v572 = vlaneseq
    %v573 = vshrl.u32 %v572, 7
    %v574 = vsub.s32 0, %v573
    %v575 = vrot.slane %v570, %v574
    %v576 = vlaneseq
    %v577 = vshrl.u32 %v576, 7
    %v578 = vsub.s32 1, %v577
    %v579 = vrot.slane %v570, %v578
    %582 = vmatprep.subr.mxu0 %v539
    %583 = vmatpush1.msra.mxu0 %v538
    %584 = vmatprep.subr.mxu0 %v541
    %585 = vmatpush1.msra.mxu0 %v540
    %586 = vmatprep.subr.mxu0 %v543
    %587 = vmatpush1.msra.mxu0 %v542
    %588 = vmatprep.subr.mxu0 %v545
    %589 = vmatpush1.msra.mxu0 %v544
    %590 = vmatprep.subr.mxu0 %v547
    %591 = vmatpush1.msra.mxu0 %v546
    %592 = vmatprep.subr.mxu0 %v549
    %593 = vmatpush1.msra.mxu0 %v548
    %594 = vmatprep.subr.mxu0 %v551
    %595 = vmatpush1.msra.mxu0 %v550
    %596 = vmatprep.subr.mxu0 %v553
    %597 = vmatpush1.msra.mxu0 %v552
    %598 = vmatprep.subr.mxu0 %v555
    %599 = vmatpush1.msra.mxu0 %v554
    %600 = vmatprep.subr.mxu0 %v557
    %601 = vmatpush1.msra.mxu0 %v556
    %602 = vmatprep.subr.mxu0 %v559
    %603 = vmatpush1.msra.mxu0 %v558
    %604 = vmatprep.subr.mxu0 %v561
    %605 = vmatpush1.msra.mxu0 %v560
    %606 = vmatprep.subr.mxu0 %v563
    %607 = vmatpush1.msra.mxu0 %v562
    %608 = vmatprep.subr.mxu0 %v565
    %609 = vmatpush1.msra.mxu0 %v564
    %610 = vmatprep.subr.mxu0 %v567
    %611 = vmatpush1.msra.mxu0 %v566
    %612 = vmatprep.subr.mxu0 %v569
    %613 = vmatpush1.msra.mxu0 %v568
    %614 = vmatprep.subr.mxu0 0.0
    %615 = vmatpush1.msra.mxu0 0.0
    %616 = vmatprep.subr.mxu0 0.0
    %617 = vmatpush1.msra.mxu0 0.0
    %618 = vmatprep.subr.mxu0 0.0
    %619 = vmatpush1.msra.mxu0 0.0
    %620 = vmatprep.subr.mxu0 0.0
    %621 = vmatpush1.msra.mxu0 0.0
    %622 = vmatprep.subr.mxu0 0.0
    %623 = vmatpush1.msra.mxu0 0.0
    %624 = vmatprep.subr.mxu0 0.0
    %625 = vmatpush1.msra.mxu0 0.0
    %626 = vmatprep.subr.mxu0 0.0
    %627 = vmatpush1.msra.mxu0 0.0
    %628 = vmatprep.subr.mxu0 0.0
    %629 = vmatpush1.msra.mxu0 0.0
    %630 = vmatprep.subr.mxu0 0.0
    %631 = vmatpush1.msra.mxu0 0.0
    %632 = vmatprep.subr.mxu0 0.0
    %633 = vmatpush1.msra.mxu0 0.0
    %634 = vmatprep.subr.mxu0 0.0
    %635 = vmatpush1.msra.mxu0 0.0
    %636 = vmatprep.subr.mxu0 0.0
    %637 = vmatpush1.msra.mxu0 0.0
    %638 = vmatprep.subr.mxu0 0.0
    %639 = vmatpush1.msra.mxu0 0.0
    %640 = vmatprep.subr.mxu0 0.0
    %641 = vmatpush1.msra.mxu0 0.0
    %642 = vmatprep.subr.mxu0 0.0
    %643 = vmatpush1.msra.mxu0 0.0
    %644 = vmatprep.subr.mxu0 0.0
    %645 = vmatpush1.msra.mxu0 0.0
    %646 = vmatprep.mubr.f32.mxu0 0.0
    %647 = vmatmul.mubr.f32.gmra.mrb[0].mxu0 %v537
    %v648 = vpop.f32.mrb[0].mxu0
    %v649 = vadd.f32 %v575, %v648
    %v650 = vpop.f32.mrb[0].mxu0
    %v651 = vadd.f32 %v579, %v650
    %652 = vdwg.mxu0
    %v653 = vmax.f32 %v649, 0.0
    %v654 = vmax.f32 %v651, 0.0
    %v655 = vld [vmem:[%s10] sm:$0xff]
    %v656 = vld [vmem:[%s10 + $0x8] sm:$0xff]
    %v657 = vld [vmem:[%s10 + $0x10] sm:$0xff]
    %v658 = vld [vmem:[%s10 + $0x18] sm:$0xff]
    %v659 = vld [vmem:[%s10 + $0x20] sm:$0xff]
    %v660 = vld [vmem:[%s10 + $0x28] sm:$0xff]
    %v661 = vld [vmem:[%s10 + $0x30] sm:$0xff]
    %v662 = vld [vmem:[%s10 + $0x38] sm:$0xff]
    %v663 = vld [vmem:[%s10 + $0x40] sm:$0xff]
    %v664 = vld [vmem:[%s10 + $0x48] sm:$0xff]
    %v665 = vld [vmem:[%s10 + $0x50] sm:$0xff]
    %v666 = vld [vmem:[%s10 + $0x58] sm:$0xff]
    %v667 = vld [vmem:[%s10 + $0x60] sm:$0xff]
    %v668 = vld [vmem:[%s10 + $0x68] sm:$0xff]
    %v669 = vld [vmem:[%s10 + $0x70] sm:$0xff]
    %v670 = vld [vmem:[%s10 + $0x78] sm:$0xff]
    %v671 = vld [vmem:[%s10 + $0x80] sm:$0xff]
    %v672 = vld [vmem:[%s10 + $0x88] sm:$0xff]
    %v673 = vld [vmem:[%s10 + $0x90] sm:$0xff]
    %v674 = vld [vmem:[%s10 + $0x98] sm:$0xff]
    %v675 = vld [vmem:[%s10 + $0xa0] sm:$0xff]
    %v676 = vld [vmem:[%s10 + $0xa8] sm:$0xff]
    %v677 = vld [vmem:[%s10 + $0xb0] sm:$0xff]
    %v678 = vld [vmem:[%s10 + $0xb8] sm:$0xff]
    %v679 = vld [vmem:[%s10 + $0xc0] sm:$0xff]
    %v680 = vld [vmem:[%s10 + $0xc8] sm:$0xff]
    %v681 = vld [vmem:[%s10 + $0xd0] sm:$0xff]
    %v682 = vld [vmem:[%s10 + $0xd8] sm:$0xff]
    %v683 = vld [vmem:[%s10 + $0xe0] sm:$0xff]
    %v684 = vld [vmem:[%s10 + $0xe8] sm:$0xff]
    %v685 = vld [vmem:[%s10 + $0xf0] sm:$0xff]
    %v686 = vld [vmem:[%s10 + $0xf8] sm:$0xff]
    %v687 = vld [vmem:[%s11] sm:$0x1]
    %v689 = vlaneseq
    %v690 = vshrl.u32 %v689, 7
    %v691 = vsub.s32 0, %v690
    %v692 = vrot.slane %v687, %v691
    %694 = vmatprep.subr.mxu0 0.0
    %695 = vmatpush1.msra.mxu0 %v655
    %696 = vmatprep.subr.mxu0 0.0
    %697 = vmatpush1.msra.mxu0 %v656
    %698 = vmatprep.subr.mxu0 0.0
    %699 = vmatpush1.msra.mxu0 %v657
    %700 = vmatprep.subr.mxu0 0.0
    %701 = vmatpush1.msra.mxu0 %v658
    %702 = vmatprep.subr.mxu0 0.0
    %703 = vmatpush1.msra.mxu0 %v659
    %704 = vmatprep.subr.mxu0 0.0
    %705 = vmatpush1.msra.mxu0 %v660
    %706 = vmatprep.subr.mxu0 0.0
    %707 = vmatpush1.msra.mxu0 %v661
    %708 = vmatprep.subr.mxu0 0.0
    %709 = vmatpush1.msra.mxu0 %v662
    %710 = vmatprep.subr.mxu0 0.0
    %711 = vmatpush1.msra.mxu0 %v663
    %712 = vmatprep.subr.mxu0 0.0
    %713 = vmatpush1.msra.mxu0 %v664
    %714 = vmatprep.subr.mxu0 0.0
    %715 = vmatpush1.msra.mxu0 %v665
    %716 = vmatprep.subr.mxu0 0.0
    %717 = vmatpush1.msra.mxu0 %v666
    %718 = vmatprep.subr.mxu0 0.0
    %719 = vmatpush1.msra.mxu0 %v667
    %720 = vmatprep.subr.mxu0 0.0
    %721 = vmatpush1.msra.mxu0 %v668
    %722 = vmatprep.subr.mxu0 0.0
    %723 = vmatpush1.msra.mxu0 %v669
    %724 = vmatprep.subr.mxu0 0.0
    %725 = vmatpush1.msra.mxu0 %v670
    %726 = vmatprep.subr.mxu0 0.0
    %727 = vmatpush1.msra.mxu0 %v671
    %728 = vmatprep.subr.mxu0 0.0
    %729 = vmatpush1.msra.mxu0 %v672
    %730 = vmatprep.subr.mxu0 0.0
    %731 = vmatpush1.msra.mxu0 %v673
    %732 = vmatprep.subr.mxu0 0.0
    %733 = vmatpush1.msra.mxu0 %v674
    %734 = vmatprep.subr.mxu0 0.0
    %735 = vmatpush1.msra.mxu0 %v675
    %736 = vmatprep.subr.mxu0 0.0
    %737 = vmatpush1.msra.mxu0 %v676
    %738 = vmatprep.subr.mxu0 0.0
    %739 = vmatpush1.msra.mxu0 %v677
    %740 = vmatprep.subr.mxu0 0.0
    %741 = vmatpush1.msra.mxu0 %v678
    %742 = vmatprep.subr.mxu0 0.0
    %743 = vmatpush1.msra.mxu0 %v679
    %744 = vmatprep.subr.mxu0 0.0
    %745 = vmatpush1.msra.mxu0 %v680
    %746 = vmatprep.subr.mxu0 0.0
    %747 = vmatpush1.msra.mxu0 %v681
    %748 = vmatprep.subr.mxu0 0.0
    %749 = vmatpush1.msra.mxu0 %v682
    %750 = vmatprep.subr.mxu0 0.0
    %751 = vmatpush1.msra.mxu0 %v683
    %752 = vmatprep.subr.mxu0 0.0
    %753 = vmatpush1.msra.mxu0 %v684
    %754 = vmatprep.subr.mxu0 0.0
    %755 = vmatpush1.msra.mxu0 %v685
    %756 = vmatprep.subr.mxu0 0.0
    %757 = vmatpush1.msra.mxu0 %v686
    %758 = vmatprep.mubr.f32.mxu0 %v654
    %759 = vmatmul.mubr.f32.gmra.mrb[0].mxu0 %v653
    %v760 = vpop.f32.mrb[0].mxu0
    %v761 = vadd.f32 %v692, %v760
    %v762 = vpop.f32.mrb[0].mxu0
    %763 = vdwg.mxu0
    %v764 = vadd.f32 %v537, %v761
    %v765 = vld [vmem:[%s12] sm:$0x1]
    %v766 = vld [vmem:[%s13] sm:$0x1]
    %767 = vadd.xlane.f32.xlu0 %v764
    %v768 = vpop.xlane.xlu0 %767
    %v769 = vmul.f32 %v768, 0.012345679
    %v770 = vsub.f32 %v764, %v769
    %v771 = vmul.f32 %v770, %v53
    %v772 = vmul.f32 %v771, %v771
    %773 = vadd.xlane.f32.xlu0 %v772
    %v774 = vpop.xlane.xlu0 %773
    %v775 = vmul.f32 %v774, 0.012345679
    %v776 = vadd.f32 %v775, 1e-05
    %v777 = vrsqrt.pop %v776
    %v778 = vmul.f32 %v771, %v777
    %v780 = vlaneseq
    %v781 = vshrl.u32 %v780, 7
    %v782 = vsub.s32 0, %v781
    %v783 = vrot.slane %v765, %v782
    %v785 = vmul.f32 %v778, %v783
    %v787 = vlaneseq
    %v788 = vshrl.u32 %v787, 7
    %v789 = vsub.s32 0, %v788
    %v790 = vrot.slane %v766, %v789
    %v792 = vadd.f32 %v785, %v790
    %793 = vst [vmem:[#allocation2] sm:$0xff] %v792
    // Predicated region
    $region58: #{transformer_block_forward.1} parent=1 // pred_check
      _
    $region59: #{transformer_block_forward.1} parent=1 // pred_check_branch
      %795 = sbr.rel (0) target = $region61
    $region60: #{transformer_block_forward.1} parent=1 // pred_region
      %s797 = ssub.s32 128, 128
      %798 = vsyncadd [#allocation3], %s797
      %s800 = sshll.u32 [#allocation2], 4
      %s801 = int_to_ptr.vmem [resolvable:$true] %s800
      %803 = dma.vmem_to_hbm [thread:$0]  %s801, 128, %s14, [#allocation3]
    $region61: #{transformer_block_forward.1} parent=1 // pred_fallthru
      _
    // Predicated region
    $region62: #{transformer_block_forward.1} parent=1 // pred_check
      _
    $region63: #{transformer_block_forward.1} parent=1 // pred_check_branch
      %805 = sbr.rel (0) target = $region65
    $region64: #{transformer_block_forward.1} parent=1 // pred_region
      %806 = dma.done [#allocation3], 128
    $region65: #{transformer_block_forward.1} parent=1 // pred_fallthru
      _
    %807 = vsyncpa [#allocation3], 1

</llo_original>
